<compile_context>
chip_gen: v7x
topology: tpu7x:2x2x1
jax: 0.10.0
libtpu: 0.0.40
codegen_flags: <defaults>
</compile_context>

<pallas_src>
import jax
import jax.numpy as jnp
from jax.experimental import pallas as pl
from jax.experimental.pallas import tpu as pltpu

F = 32    # num_feats == renderer in_dim
H = 32    # renderer hidden_dim
OUT = 1   # renderer out_dim


def _pick_tile_n(n):
    """Largest lane-dense pixel tile; prefer >=2 grid steps if tiles can stay >=256 wide."""
    best = None
    for t in (2048, 1024, 512, 256):
        if n % t == 0:
            best = t
            break
    if best is None:
        best = 128 if n % 128 == 0 else n   # full-array block is always layout-legal
        return best
    if n // best < 2:
        for t in (1024, 512, 256):
            if t < best and n % t == 0 and n // t >= 2:
                return t
    return best


def _renderer_kernel(xy_ref, zf_ref, w1_ref, b1_ref, w2_ref, b2_ref,
                     w3_ref, b3_ref, o_ref):
    # xy_ref: (F, TILE_N)   zf_ref: (B, F, 1)   w1: (H, F)  w2: (H, H)
    # b1/b2: (H, 1)         w3: (H, OUT=1)      b3: (1, 1)  o_ref: (B, OUT, TILE_N)
    xy_t = xy_ref[...]
    w1 = w1_ref[...]
    w2 = w2_ref[...]
    w3 = w3_ref[...]
    b1 = b1_ref[...]
    b2 = b2_ref[...]
    b3 = b3_ref[...]
    bsz = zf_ref.shape[0]
    for b in range(bsz):                                   # B is small & static -> unrolled
        feat = xy_t * zf_ref[b]                            # (F, TILE_N) * (F, 1)
        h = jnp.dot(w1, feat, preferred_element_type=jnp.float32) + b1   # (H, TILE_N)
        h = jnp.maximum(h, 0.0)
        h = jnp.dot(w2, h, preferred_element_type=jnp.float32) + b2      # (H, TILE_N)
        h = jnp.maximum(h, 0.0)
        # Final (H -> OUT=1) layer off the MXU: sublane reduce keeps the result lane-dense.
        out = jnp.sum(w3 * h, axis=0, keepdims=True) + b3                # (1, TILE_N)
        o_ref[b] = out.astype(o_ref.dtype)


def renderer_pallas(xy_feat, z_feat, params):
    """xy_feat: (N, F) f32, z_feat: (B, F) f32 -> (B, OUT, N) f32 (channels-first)."""
    N, f_dim = xy_feat.shape
    B = z_feat.shape[0]
    w1, b1, w2, b2, w3, b3 = params            # stored (in, out) / (1, out)
    assert f_dim == F and w3.shape[1] == OUT == 1

    tile_n = _pick_tile_n(N)
    assert N % tile_n == 0
    grid = (N // tile_n,)

    # Transpose everything to the pixels-on-lanes layout (plain-JAX glue, tiny).
    xy_t = xy_feat.T                           # (F, N)
    zf_t = z_feat[:, :, None]                  # (B, F, 1)
    w1_t, w2_t = w1.T, w2.T                    # (H, F), (H, H)
    b1_t, b2_t = b1.T, b2.T                    # (H, 1), (H, 1)
    b3_t = b3.T                                # (OUT, 1) == (1, 1)
    # w3 stays (H, OUT): the last layer is computed as a sublane reduction.

    flops = 2 * B * N * (F * H + H * H + H * OUT) + B * N * F
    bytes_accessed = 4 * (F * N + B * F + F * H + H + H * H + H + H * OUT + OUT
                          + B * OUT * N)
    cost = pl.CostEstimate(flops=int(flops), transcendentals=0,
                           bytes_accessed=int(bytes_accessed))

    return pl.pallas_call(
        _renderer_kernel,
        out_shape=jax.ShapeDtypeStruct((B, OUT, N), jnp.float32),
        grid_spec=pltpu.PrefetchScalarGridSpec(
            num_scalar_prefetch=0,
            grid=grid,
            in_specs=[
                pl.BlockSpec((F, tile_n), lambda n: (0, n)),     # xy_feat_T tile
                pl.BlockSpec((B, F, 1), lambda n: (0, 0, 0)),    # all batches' z_feat
                pl.BlockSpec((H, F), lambda n: (0, 0)),          # W1_T
                pl.BlockSpec((H, 1), lambda n: (0, 0)),          # b1
                pl.BlockSpec((H, H), lambda n: (0, 0)),          # W2_T
                pl.BlockSpec((H, 1), lambda n: (0, 0)),          # b2
                pl.BlockSpec((H, OUT), lambda n: (0, 0)),        # w3 (reduce weights)
                pl.BlockSpec((OUT, 1), lambda n: (0, 0)),        # b3
            ],
            out_specs=pl.BlockSpec((B, OUT, tile_n), lambda n: (0, 0, n)),
        ),
        compiler_params=pltpu.CompilerParams(
            dimension_semantics=("parallel",)),
        cost_estimate=cost,
    )(xy_t, zf_t, w1_t, b1_t, w2_t, b2_t, w3, b3_t)


# ----------------------------- glue (plain JAX) -----------------------------

def create_coords(x_dim, y_dim, x_max, y_max):
    """Mirrors G_Tensor3D.create_coords (including torch's half_dx start for ys)."""
    half_dx, half_dy = 0.5 / x_dim, 0.5 / y_dim
    xs = jnp.linspace(half_dx, 1.0 - half_dx, x_dim)
    ys = jnp.linspace(half_dx, 1.0 - half_dy, y_dim)   # half_dx start: matches torch ref
    xv, yv = jnp.meshgrid(xs, ys, indexing="ij")
    xy = jnp.stack((yv.flatten(), xv.flatten())).T                     # (N, 2)
    xs_scaled = xy * jnp.array([x_max, y_max], dtype=jnp.float32)
    indices = xs_scaled.astype(jnp.int32)              # trunc == torch .long() (positive)
    x0 = jnp.clip(indices[:, 0], 0, x_max - 1)
    y0 = jnp.clip(indices[:, 1], 0, y_max - 1)
    x1 = jnp.minimum(x0 + 1, x_max - 1)
    y1 = jnp.minimum(y0 + 1, y_max - 1)
    lerp_weights = xs_scaled - indices.astype(jnp.float32)             # (N, 2), torch-equal
    return x0, y0, x1, y1, lerp_weights


def sample_xy_feat(data, coords):
    """Bilinear interpolation of the (x_mode, y_mode, F) plane -> (N, F)."""
    x0, y0, x1, y1, lw = coords
    wx, wy = lw[:, 0:1], lw[:, 1:2]
    return (data[y0, x0] * (1.0 - wx) * (1.0 - wy)
            + data[y0, x1] * wx * (1.0 - wy)
            + data[y1, x0] * (1.0 - wx) * wy
            + data[y1, x1] * wx * wy)


def sample_z_feat(z_data, z, z_min, z_max, z_dim):
    """Linear interpolation along z -> (B, F). Mirrors G_Tensor3D z path."""
    zn = (z_dim - 1) * (z - z_min) / (z_max - z_min)
    zt = jnp.trunc(zn).astype(jnp.int32)
    z0 = jnp.clip(zt, 0, z_dim - 1)
    z1 = jnp.minimum(z0 + 1, z_dim - 1)
    zw = (zn - zt.astype(jnp.float32))[:, None]
    return z_data[z0] * (1.0 - zw) + z_data[z1] * zw


def g_tensor3d_forward(z, data, z_data, coords, mlp_params,
                       x_dim, y_dim, z_min, z_max, z_dim):
    xy_feat = sample_xy_feat(data, coords)                  # (N, F)
    z_feat = sample_z_feat(z_data, z, z_min, z_max, z_dim)  # (B, F)
    out = renderer_pallas(xy_feat, z_feat, mlp_params)      # (B, 1, N) — already NCHW order
    b = z.shape[0]
    return out.reshape(b, 1, x_dim, y_dim)                  # matches torch out.view(b,1,w,h)


# ------------------------------- main ---------------------------------------

if __name__ == "__main__":
    # Module hyperparameters (small, consistent with the torch module)
    x_mode = y_mode = 16
    x_dim = y_dim = 16        # x_max = x_mode, y_max = y_mode
    z_dim = 8
    z_min, z_max = 0.0, 1.0
    B = 2

    key = jax.random.PRNGKey(0)
    k = jax.random.split(key, 10)

    # Parameters (deterministic synthetic init matching __init__ shapes)
    data = 0.0002 * jax.random.normal(k[0], (x_mode, y_mode, F), jnp.float32)
    z_data = 0.5 * jax.random.normal(k[1], (z_dim, F), jnp.float32)

    def linear_init(kw, kb, fan_in, fan_out):
        bound = 1.0 / jnp.sqrt(fan_in)
        w = jax.random.uniform(kw, (fan_in, fan_out), jnp.float32, -bound, bound)
        b = jax.random.uniform(kb, (1, fan_out), jnp.float32, -bound, bound)
        return w, b

    w1, b1 = linear_init(k[2], k[3], F, H)
    w2, b2 = linear_init(k[4], k[5], H, H)
    w3, b3 = linear_init(k[6], k[7], H, OUT)
    mlp_params = (w1, b1, w2, b2, w3, b3)

    coords = create_coords(x_dim, y_dim, x_mode, y_mode)

    # Input: z values in [z_min, z_max]
    z = jax.random.uniform(k[8], (B,), jnp.float32, z_min, z_max)

    out = g_tensor3d_forward(z, data, z_data, coords, mlp_params,
                             x_dim, y_dim, z_min, z_max, z_dim)
    out = jax.block_until_ready(out)
    assert out.shape == (B, 1, x_dim, y_dim)

    # Pure-JAX reference for the in-kernel hot path (torch-layout math)
    xy_feat = sample_xy_feat(data, coords)
    z_feat = sample_z_feat(z_data, z, z_min, z_max, z_dim)
    feat = xy_feat[None] * z_feat[:, None, :]
    h = jnp.maximum(feat @ w1 + b1, 0.0)
    h = jnp.maximum(h @ w2 + b2, 0.0)
    ref = (h @ w3 + b3).reshape(B, 1, x_dim, y_dim)
    assert jnp.allclose(out, ref, atol=1e-5, rtol=1e-4)

    print("KERNEL_OK")
</pallas_src>

<mosaic_0001>
module attributes {stable_mosaic.version = 11 : i64} {
  func.func @_renderer_kernel(%arg0: i32, %arg1: memref<32x256xf32, #tpu.memory_space<vmem>>, %arg2: memref<2x32x1xf32, #tpu.memory_space<vmem>>, %arg3: memref<32x32xf32, #tpu.memory_space<vmem>>, %arg4: memref<32x1xf32, #tpu.memory_space<vmem>>, %arg5: memref<32x32xf32, #tpu.memory_space<vmem>>, %arg6: memref<32x1xf32, #tpu.memory_space<vmem>>, %arg7: memref<32x1xf32, #tpu.memory_space<vmem>>, %arg8: memref<1x1xf32, #tpu.memory_space<vmem>>, %arg9: memref<2x1x256xf32, #tpu.memory_space<vmem>>) attributes {dimension_semantics = [#tpu.dimension_semantics<parallel>], iteration_bounds = array<i64: 1>, scalar_prefetch = 0 : i64, scratch_operands = 0 : i64, tpu.core_type = #tpu.core_type<tc>, window_params = [{transform_indices = @transform_0, window_bounds = array<i64: 32, 256>}, {pipeline_mode = #tpu.pipeline_mode<synchronous>, transform_indices = @transform_1, window_bounds = array<i64: 2, 32, 1>}, {pipeline_mode = #tpu.pipeline_mode<synchronous>, transform_indices = @transform_2, window_bounds = array<i64: 32, 32>}, {pipeline_mode = #tpu.pipeline_mode<synchronous>, transform_indices = @transform_3, window_bounds = array<i64: 32, 1>}, {pipeline_mode = #tpu.pipeline_mode<synchronous>, transform_indices = @transform_4, window_bounds = array<i64: 32, 32>}, {pipeline_mode = #tpu.pipeline_mode<synchronous>, transform_indices = @transform_5, window_bounds = array<i64: 32, 1>}, {pipeline_mode = #tpu.pipeline_mode<synchronous>, transform_indices = @transform_6, window_bounds = array<i64: 32, 1>}, {pipeline_mode = #tpu.pipeline_mode<synchronous>, transform_indices = @transform_7, window_bounds = array<i64: 1, 1>}, {transform_indices = @transform_8, window_bounds = array<i64: 2, 1, 256>}]} {
    %c0 = arith.constant 0 : index
    %c0_0 = arith.constant 0 : index
    %0 = vector.load %arg1[%c0, %c0_0] : memref<32x256xf32, #tpu.memory_space<vmem>>, vector<32x256xf32>
    %c0_1 = arith.constant 0 : index
    %c0_2 = arith.constant 0 : index
    %1 = vector.load %arg3[%c0_1, %c0_2] : memref<32x32xf32, #tpu.memory_space<vmem>>, vector<32x32xf32>
    %c0_3 = arith.constant 0 : index
    %c0_4 = arith.constant 0 : index
    %2 = vector.load %arg5[%c0_3, %c0_4] : memref<32x32xf32, #tpu.memory_space<vmem>>, vector<32x32xf32>
    %c0_5 = arith.constant 0 : index
    %c0_6 = arith.constant 0 : index
    %3 = vector.load %arg7[%c0_5, %c0_6] : memref<32x1xf32, #tpu.memory_space<vmem>>, vector<32x1xf32>
    %c0_7 = arith.constant 0 : index
    %c0_8 = arith.constant 0 : index
    %4 = vector.load %arg4[%c0_7, %c0_8] : memref<32x1xf32, #tpu.memory_space<vmem>>, vector<32x1xf32>
    %c0_9 = arith.constant 0 : index
    %c0_10 = arith.constant 0 : index
    %5 = vector.load %arg6[%c0_9, %c0_10] : memref<32x1xf32, #tpu.memory_space<vmem>>, vector<32x1xf32>
    %c0_11 = arith.constant 0 : index
    %c0_12 = arith.constant 0 : index
    %6 = vector.load %arg8[%c0_11, %c0_12] : memref<1x1xf32, #tpu.memory_space<vmem>>, vector<1x1xf32>
    %c0_13 = arith.constant 0 : index
    %c0_14 = arith.constant 0 : index
    %c0_15 = arith.constant 0 : index
    %7 = vector.load %arg2[%c0_13, %c0_14, %c0_15] : memref<2x32x1xf32, #tpu.memory_space<vmem>>, vector<1x32x1xf32>
    %8 = vector.shape_cast %7 : vector<1x32x1xf32> to vector<32x1xf32>
    %9 = vector.broadcast %8 : vector<32x1xf32> to vector<32x256xf32>
    %10 = arith.mulf %0, %9 : vector<32x256xf32>
    %cst = arith.constant dense<0.000000e+00> : vector<32x256xf32>
    %11 = tpu.matmul %1, %10, %cst {dimension_numbers = #tpu.dot_dimension_numbers<[1], [0], [0], [1], [0, 0, 1, 1], [], []>} : vector<32x32xf32>, vector<32x256xf32>, vector<32x256xf32> -> vector<32x256xf32>
    %12 = vector.broadcast %4 : vector<32x1xf32> to vector<32x256xf32>
    %13 = arith.addf %11, %12 : vector<32x256xf32>
    %cst_16 = arith.constant 0.000000e+00 : f32
    %14 = vector.broadcast %cst_16 : f32 to vector<32x256xf32>
    %15 = arith.maximumf %13, %14 : vector<32x256xf32>
    %cst_17 = arith.constant dense<0.000000e+00> : vector<32x256xf32>
    %16 = tpu.matmul %2, %15, %cst_17 {dimension_numbers = #tpu.dot_dimension_numbers<[1], [0], [0], [1], [0, 0, 1, 1], [], []>} : vector<32x32xf32>, vector<32x256xf32>, vector<32x256xf32> -> vector<32x256xf32>
    %17 = vector.broadcast %5 : vector<32x1xf32> to vector<32x256xf32>
    %18 = arith.addf %16, %17 : vector<32x256xf32>
    %cst_18 = arith.constant 0.000000e+00 : f32
    %19 = vector.broadcast %cst_18 : f32 to vector<32x256xf32>
    %20 = arith.maximumf %18, %19 : vector<32x256xf32>
    %21 = vector.broadcast %3 : vector<32x1xf32> to vector<32x256xf32>
    %22 = arith.mulf %21, %20 : vector<32x256xf32>
    %cst_19 = arith.constant dense<0.000000e+00> : vector<256xf32>
    %23 = vector.multi_reduction <add>, %22, %cst_19 [0] : vector<32x256xf32> to vector<256xf32>
    %24 = vector.shape_cast %23 : vector<256xf32> to vector<1x256xf32>
    %25 = vector.broadcast %6 : vector<1x1xf32> to vector<1x256xf32>
    %26 = arith.addf %24, %25 : vector<1x256xf32>
    %c0_20 = arith.constant 0 : index
    %c0_21 = arith.constant 0 : index
    %c0_22 = arith.constant 0 : index
    %27 = vector.load %arg9[%c0_20, %c0_21, %c0_22] : memref<2x1x256xf32, #tpu.memory_space<vmem>>, vector<1x1x256xf32>
    %28 = vector.shape_cast %27 : vector<1x1x256xf32> to vector<1x256xf32>
    %29 = vector.shape_cast %26 : vector<1x256xf32> to vector<1x1x256xf32>
    tpu.vector_store %arg9[%c0_20, %c0_21, %c0_22], %29 {strides = array<i32>} : memref<2x1x256xf32, #tpu.memory_space<vmem>>, vector<1x1x256xf32>,
    %c1 = arith.constant 1 : index
    %c0_23 = arith.constant 0 : index
    %c0_24 = arith.constant 0 : index
    %30 = vector.load %arg2[%c1, %c0_23, %c0_24] : memref<2x32x1xf32, #tpu.memory_space<vmem>>, vector<1x32x1xf32>
    %31 = vector.shape_cast %30 : vector<1x32x1xf32> to vector<32x1xf32>
    %32 = vector.broadcast %31 : vector<32x1xf32> to vector<32x256xf32>
    %33 = arith.mulf %0, %32 : vector<32x256xf32>
    %cst_25 = arith.constant dense<0.000000e+00> : vector<32x256xf32>
    %34 = tpu.matmul %1, %33, %cst_25 {dimension_numbers = #tpu.dot_dimension_numbers<[1], [0], [0], [1], [0, 0, 1, 1], [], []>} : vector<32x32xf32>, vector<32x256xf32>, vector<32x256xf32> -> vector<32x256xf32>
    %35 = vector.broadcast %4 : vector<32x1xf32> to vector<32x256xf32>
    %36 = arith.addf %34, %35 : vector<32x256xf32>
    %cst_26 = arith.constant 0.000000e+00 : f32
    %37 = vector.broadcast %cst_26 : f32 to vector<32x256xf32>
    %38 = arith.maximumf %36, %37 : vector<32x256xf32>
    %cst_27 = arith.constant dense<0.000000e+00> : vector<32x256xf32>
    %39 = tpu.matmul %2, %38, %cst_27 {dimension_numbers = #tpu.dot_dimension_numbers<[1], [0], [0], [1], [0, 0, 1, 1], [], []>} : vector<32x32xf32>, vector<32x256xf32>, vector<32x256xf32> -> vector<32x256xf32>
    %40 = vector.broadcast %5 : vector<32x1xf32> to vector<32x256xf32>
    %41 = arith.addf %39, %40 : vector<32x256xf32>
    %cst_28 = arith.constant 0.000000e+00 : f32
    %42 = vector.broadcast %cst_28 : f32 to vector<32x256xf32>
    %43 = arith.maximumf %41, %42 : vector<32x256xf32>
    %44 = vector.broadcast %3 : vector<32x1xf32> to vector<32x256xf32>
    %45 = arith.mulf %44, %43 : vector<32x256xf32>
    %cst_29 = arith.constant dense<0.000000e+00> : vector<256xf32>
    %46 = vector.multi_reduction <add>, %45, %cst_29 [0] : vector<32x256xf32> to vector<256xf32>
    %47 = vector.shape_cast %46 : vector<256xf32> to vector<1x256xf32>
    %48 = vector.broadcast %6 : vector<1x1xf32> to vector<1x256xf32>
    %49 = arith.addf %47, %48 : vector<1x256xf32>
    %c1_30 = arith.constant 1 : index
    %c0_31 = arith.constant 0 : index
    %c0_32 = arith.constant 0 : index
    %50 = vector.load %arg9[%c1_30, %c0_31, %c0_32] : memref<2x1x256xf32, #tpu.memory_space<vmem>>, vector<1x1x256xf32>
    %51 = vector.shape_cast %50 : vector<1x1x256xf32> to vector<1x256xf32>
    %52 = vector.shape_cast %49 : vector<1x256xf32> to vector<1x1x256xf32>
    tpu.vector_store %arg9[%c1_30, %c0_31, %c0_32], %52 {strides = array<i32>} : memref<2x1x256xf32, #tpu.memory_space<vmem>>, vector<1x1x256xf32>,
    return
  }
  func.func @transform_0(%arg0: i32) -> (i32, i32) {
    %c0_i32 = arith.constant 0 : i32
    %c0_i32_0 = arith.constant 0 : i32
    return %c0_i32, %arg0 : i32, i32
  }
  func.func @transform_1(%arg0: i32) -> (i32, i32, i32) {
    %c0_i32 = arith.constant 0 : i32
    %c0_i32_0 = arith.constant 0 : i32
    %c0_i32_1 = arith.constant 0 : i32
    %c0_i32_2 = arith.constant 0 : i32
    return %c0_i32, %c0_i32_0, %c0_i32_1 : i32, i32, i32
  }
  func.func @transform_2(%arg0: i32) -> (i32, i32) {
    %c0_i32 = arith.constant 0 : i32
    %c0_i32_0 = arith.constant 0 : i32
    %c0_i32_1 = arith.constant 0 : i32
    return %c0_i32, %c0_i32_0 : i32, i32
  }
  func.func @transform_3(%arg0: i32) -> (i32, i32) {
    %c0_i32 = arith.constant 0 : i32
    %c0_i32_0 = arith.constant 0 : i32
    %c0_i32_1 = arith.constant 0 : i32
    return %c0_i32, %c0_i32_0 : i32, i32
  }
  func.func @transform_4(%arg0: i32) -> (i32, i32) {
    %c0_i32 = arith.constant 0 : i32
    %c0_i32_0 = arith.constant 0 : i32
    %c0_i32_1 = arith.constant 0 : i32
    return %c0_i32, %c0_i32_0 : i32, i32
  }
  func.func @transform_5(%arg0: i32) -> (i32, i32) {
    %c0_i32 = arith.constant 0 : i32
    %c0_i32_0 = arith.constant 0 : i32
    %c0_i32_1 = arith.constant 0 : i32
    return %c0_i32, %c0_i32_0 : i32, i32
  }
  func.func @transform_6(%arg0: i32) -> (i32, i32) {
    %c0_i32 = arith.constant 0 : i32
    %c0_i32_0 = arith.constant 0 : i32
    %c0_i32_1 = arith.constant 0 : i32
    return %c0_i32, %c0_i32_0 : i32, i32
  }
  func.func @transform_7(%arg0: i32) -> (i32, i32) {
    %c0_i32 = arith.constant 0 : i32
    %c0_i32_0 = arith.constant 0 : i32
    %c0_i32_1 = arith.constant 0 : i32
    return %c0_i32, %c0_i32_0 : i32, i32
  }
  func.func @transform_8(%arg0: i32) -> (i32, i32, i32) {
    %c0_i32 = arith.constant 0 : i32
    %c0_i32_0 = arith.constant 0 : i32
    %c0_i32_1 = arith.constant 0 : i32
    return %c0_i32, %c0_i32_0, %arg0 : i32, i32, i32
  }
}

</mosaic_0001>

<llo_original>
// kernel: tpu_custom_call.1
$region0: #{tpu_custom_call.1}
  #allocation0 [shape = 'u32[]', space=smem, size = 0x4, offset = 0x4, fixed_abs, tag = 'smem constant byte address 0x4 - core index']
  #allocation1 [shape = 'u32[144,128]{1,0:T(1,128)}', space=vmem, size = 0x12000, scoped, tag = 'internal scratch']
  #allocation2 [shape = 'f32[1,1]{1,0:T(1,128)S(1)}', space=vmem, size = 0x200, scoped, tag = 'scoped memory for tpu_custom_call.1']
  %s0 = inlined_call_operand.vmem [shape: f32[32,256], index: 0, kind: input, shape index: {}]
  %s1 = inlined_call_operand.vmem [shape: f32[2,32,1], index: 1, kind: input, shape index: {}]
  %s2 = inlined_call_operand.vmem [shape: f32[32,32], index: 2, kind: input, shape index: {}]
  %s3 = inlined_call_operand.vmem [shape: f32[32,1], index: 3, kind: input, shape index: {}]
  %s4 = inlined_call_operand.vmem [shape: f32[32,32], index: 4, kind: input, shape index: {}]
  %s5 = inlined_call_operand.vmem [shape: f32[32,1], index: 5, kind: input, shape index: {}]
  %s6 = inlined_call_operand.vmem [shape: f32[32,1], index: 6, kind: input, shape index: {}]
  %s7 = inlined_call_operand.<no memory space> [shape: f32[1,1], index: 7, kind: input, shape index: {}]
  %s8 = inlined_call_operand.hbm [shape: f32[2,1,256], index: 8, kind: output, shape index: {}]
  %s9 = sld [smem:[#allocation0]]
  $region42: #{tpu_custom_call.1} parent=0
    _
  %s11 = ssub.s32 1, %s9
  %s12 = scalar_select 0, %s11, %s9
  %v13 = vstv %s7
  %14 = vst [vmem:[#allocation2] sm:$0x1] %v13
  $region1: #{tpu_custom_call.1} parent=0
    #allocation3 [shape = 'u8[2048]{0}', space=vmem, size = 0x800, scoped, tag = 'output window, operand 0, single buffered']
    #allocation4 [shape = 's32[1]{0}', space=sflag, size = 0x4, scoped, tag = 'scoped memory for tpu_custom_call.1']
    %15 = vsyncpa [#allocation4], 0
    // Predicated region
    $region2: #{tpu_custom_call.1} parent=1 // pred_check
      _
    $region3: #{tpu_custom_call.1} parent=1 // pred_check_branch
      %17 = sbr.rel (0) target = $region5
    $region4: #{tpu_custom_call.1} parent=1 // pred_region
      _
    $region5: #{tpu_custom_call.1} parent=1 // pred_fallthru
      _
    // Predicated region
    $region6: #{tpu_custom_call.1} parent=1 // pred_check
      _
    $region7: #{tpu_custom_call.1} parent=1 // pred_check_branch
      %19 = sbr.rel (0) target = $region9
    $region8: #{tpu_custom_call.1} parent=1 // pred_region
      _
    $region9: #{tpu_custom_call.1} parent=1 // pred_fallthru
      _
    // Predicated region
    $region10: #{tpu_custom_call.1} parent=1 // pred_check
      _
    $region11: #{tpu_custom_call.1} parent=1 // pred_check_branch
      %21 = sbr.rel (0) target = $region13
    $region12: #{tpu_custom_call.1} parent=1 // pred_region
      _
    $region13: #{tpu_custom_call.1} parent=1 // pred_fallthru
      _
    // Predicated region
    $region14: #{tpu_custom_call.1} parent=1 // pred_check
      _
    $region15: #{tpu_custom_call.1} parent=1 // pred_check_branch
      %23 = sbr.rel (0) target = $region17
    $region16: #{tpu_custom_call.1} parent=1 // pred_region
      _
    $region17: #{tpu_custom_call.1} parent=1 // pred_fallthru
      _
    // Predicated region
    $region18: #{tpu_custom_call.1} parent=1 // pred_check
      _
    $region19: #{tpu_custom_call.1} parent=1 // pred_check_branch
      %25 = sbr.rel (0) target = $region21
    $region20: #{tpu_custom_call.1} parent=1 // pred_region
      _
    $region21: #{tpu_custom_call.1} parent=1 // pred_fallthru
      _
    // Predicated region
    $region22: #{tpu_custom_call.1} parent=1 // pred_check
      _
    $region23: #{tpu_custom_call.1} parent=1 // pred_check_branch
      %27 = sbr.rel (0) target = $region25
    $region24: #{tpu_custom_call.1} parent=1 // pred_region
      _
    $region25: #{tpu_custom_call.1} parent=1 // pred_fallthru
      _
    // Predicated region
    $region26: #{tpu_custom_call.1} parent=1 // pred_check
      _
    $region27: #{tpu_custom_call.1} parent=1 // pred_check_branch
      %29 = sbr.rel (0) target = $region29
    $region28: #{tpu_custom_call.1} parent=1 // pred_region
      _
    $region29: #{tpu_custom_call.1} parent=1 // pred_fallthru
      _
    // Predicated region
    $region30: #{tpu_custom_call.1} parent=1 // pred_check
      _
    $region31: #{tpu_custom_call.1} parent=1 // pred_check_branch
      %31 = sbr.rel (0) target = $region33
    $region32: #{tpu_custom_call.1} parent=1 // pred_region
      _
    $region33: #{tpu_custom_call.1} parent=1 // pred_fallthru
      _
    %v32 = vld [vmem:[%s0] sm:$0xff]
    %v33 = vld [vmem:[%s0 + $0x8] sm:$0xff]
    %v34 = vld [vmem:[%s0 + $0x10] sm:$0xff]
    %v35 = vld [vmem:[%s0 + $0x18] sm:$0xff]
    %v36 = vld [vmem:[%s0 + $0x20] sm:$0xff]
    %v37 = vld [vmem:[%s0 + $0x28] sm:$0xff]
    %v38 = vld [vmem:[%s0 + $0x30] sm:$0xff]
    %v39 = vld [vmem:[%s0 + $0x38] sm:$0xff]
    %v40 = vld [vmem:[%s2] sm:$0xff]
    %v41 = vld [vmem:[%s2 + $0x8] sm:$0xff]
    %v42 = vld [vmem:[%s2 + $0x10] sm:$0xff]
    %v43 = vld [vmem:[%s2 + $0x18] sm:$0xff]
    %v44 = vld [vmem:[%s4] sm:$0xff]
    %v45 = vld [vmem:[%s4 + $0x8] sm:$0xff]
    %v46 = vld [vmem:[%s4 + $0x10] sm:$0xff]
    %v47 = vld [vmem:[%s4 + $0x18] sm:$0xff]
    %v48 = vld [vmem:[%s6] sm:$0xff]
    %v49 = vld [vmem:[%s6 + $0x8] sm:$0xff]
    %v50 = vld [vmem:[%s6 + $0x10] sm:$0xff]
    %v51 = vld [vmem:[%s6 + $0x18] sm:$0xff]
    %v52 = vld [vmem:[%s3] sm:$0xff]
    %v53 = vld [vmem:[%s3 + $0x8] sm:$0xff]
    %v54 = vld [vmem:[%s3 + $0x10] sm:$0xff]
    %v55 = vld [vmem:[%s3 + $0x18] sm:$0xff]
    %v56 = vld [vmem:[%s5] sm:$0xff]
    %v57 = vld [vmem:[%s5 + $0x8] sm:$0xff]
    %v58 = vld [vmem:[%s5 + $0x10] sm:$0xff]
    %v59 = vld [vmem:[%s5 + $0x18] sm:$0xff]
    %v60 = vld [vmem:[#allocation2] sm:$0x1]
    %v61 = vld [vmem:[%s1] sm:$0xff]
    %v62 = vld [vmem:[%s1 + $0x8] sm:$0xff]
    %v63 = vld [vmem:[%s1 + $0x10] sm:$0xff]
    %v64 = vld [vmem:[%s1 + $0x18] sm:$0xff]
    %66 = vset.pattern.permute.xlu0 0
    %67 = vperm.xlu0 %66, %v61
    %v68 = vpop.permute.xlu0 %67
    %71 = vset.pattern.permute.xlu0 0
    %72 = vperm.xlu0 %71, %v62
    %v73 = vpop.permute.xlu0 %72
    %76 = vset.pattern.permute.xlu0 0
    %77 = vperm.xlu0 %76, %v63
    %v78 = vpop.permute.xlu0 %77
    %81 = vset.pattern.permute.xlu0 0
    %82 = vperm.xlu0 %81, %v64
    %v83 = vpop.permute.xlu0 %82
    %v85 = vmul.f32 %v32, %v68
    %v86 = vmul.f32 %v33, %v68
    %v87 = vmul.f32 %v34, %v73
    %v88 = vmul.f32 %v35, %v73
    %v89 = vmul.f32 %v36, %v78
    %v90 = vmul.f32 %v37, %v78
    %v91 = vmul.f32 %v38, %v83
    %v92 = vmul.f32 %v39, %v83
    %94 = vset.pattern.permute.xlu0 0
    %95 = vperm.xlu0 %94, %v52
    %v96 = vpop.permute.xlu0 %95
    %99 = vset.pattern.permute.xlu0 0
    %100 = vperm.xlu0 %99, %v53
    %v101 = vpop.permute.xlu0 %100
    %104 = vset.pattern.permute.xlu0 0
    %105 = vperm.xlu0 %104, %v54
    %v106 = vpop.permute.xlu0 %105
    %109 = vset.pattern.permute.xlu0 0
    %110 = vperm.xlu0 %109, %v55
    %v111 = vpop.permute.xlu0 %110
    %vm113 = vcmask 261120
    %v115 = vsel %vm113, %v40, 0
    %v118 = vsel %vm113, %v41, 0
    %v121 = vsel %vm113, %v42, 0
    %v124 = vsel %vm113, %v43, 0
    %126 = vmatprep.subr.mxu0 %v86
    %127 = vmatpush1.msra.mxu0 %v85
    %128 = vmatprep.subr.mxu0 %v88
    %129 = vmatpush1.msra.mxu0 %v87
    %130 = vmatprep.subr.mxu0 %v90
    %131 = vmatpush1.msra.mxu0 %v89
    %132 = vmatprep.subr.mxu0 %v92
    %133 = vmatpush1.msra.mxu0 %v91
    %134 = vmatprep.subr.mxu0 0.0
    %135 = vmatpush1.msra.mxu0 0.0
    %136 = vmatprep.subr.mxu0 0.0
    %137 = vmatpush1.msra.mxu0 0.0
    %138 = vmatprep.subr.mxu0 0.0
    %139 = vmatpush1.msra.mxu0 0.0
    %140 = vmatprep.subr.mxu0 0.0
    %141 = vmatpush1.msra.mxu0 0.0
    %142 = vmatprep.subr.mxu0 0.0
    %143 = vmatpush1.msra.mxu0 0.0
    %144 = vmatprep.subr.mxu0 0.0
    %145 = vmatpush1.msra.mxu0 0.0
    %146 = vmatprep.subr.mxu0 0.0
    %147 = vmatpush1.msra.mxu0 0.0
    %148 = vmatprep.subr.mxu0 0.0
    %149 = vmatpush1.msra.mxu0 0.0
    %150 = vmatprep.subr.mxu0 0.0
    %151 = vmatpush1.msra.mxu0 0.0
    %152 = vmatprep.subr.mxu0 0.0
    %153 = vmatpush1.msra.mxu0 0.0
    %154 = vmatprep.subr.mxu0 0.0
    %155 = vmatpush1.msra.mxu0 0.0
    %156 = vmatprep.subr.mxu0 0.0
    %157 = vmatpush1.msra.mxu0 0.0
    %158 = vmatprep.subr.mxu0 0.0
    %159 = vmatpush1.msra.mxu0 0.0
    %160 = vmatprep.subr.mxu0 0.0
    %161 = vmatpush1.msra.mxu0 0.0
    %162 = vmatprep.subr.mxu0 0.0
    %163 = vmatpush1.msra.mxu0 0.0
    %164 = vmatprep.subr.mxu0 0.0
    %165 = vmatpush1.msra.mxu0 0.0
    %166 = vmatprep.subr.mxu0 0.0
    %167 = vmatpush1.msra.mxu0 0.0
    %168 = vmatprep.subr.mxu0 0.0
    %169 = vmatpush1.msra.mxu0 0.0
    %170 = vmatprep.subr.mxu0 0.0
    %171 = vmatpush1.msra.mxu0 0.0
    %172 = vmatprep.subr.mxu0 0.0
    %173 = vmatpush1.msra.mxu0 0.0
    %174 = vmatprep.subr.mxu0 0.0
    %175 = vmatpush1.msra.mxu0 0.0
    %176 = vmatprep.subr.mxu0 0.0
    %177 = vmatpush1.msra.mxu0 0.0
    %178 = vmatprep.subr.mxu0 0.0
    %179 = vmatpush1.msra.mxu0 0.0
    %180 = vmatprep.subr.mxu0 0.0
    %181 = vmatpush1.msra.mxu0 0.0
    %182 = vmatprep.subr.mxu0 0.0
    %183 = vmatpush1.msra.mxu0 0.0
    %184 = vmatprep.subr.mxu0 0.0
    %185 = vmatpush1.msra.mxu0 0.0
    %186 = vmatprep.subr.mxu0 0.0
    %187 = vmatpush1.msra.mxu0 0.0
    %188 = vmatprep.subr.mxu0 0.0
    %189 = vmatpush1.msra.mxu0 0.0
    %190 = vmatprep.mubr.f32.mxu0 0.0
    %191 = vmatmul.mubr.f32.gmra.mrb[0].mxu0 %v115
    %v192 = vpop.f32.mrb[0].mxu0
    %v193 = vadd.f32 %v96, %v192
    %v194 = vpop.f32.mrb[0].mxu0
    %v195 = vadd.f32 %v96, %v194
    %196 = vmatprep.mubr.f32.mxu0 0.0
    %197 = vmatmul.mubr.f32.gmra.mrb[0].mxu0 %v118
    %v198 = vpop.f32.mrb[0].mxu0
    %v199 = vadd.f32 %v101, %v198
    %v200 = vpop.f32.mrb[0].mxu0
    %v201 = vadd.f32 %v101, %v200
    %202 = vmatprep.mubr.f32.mxu0 0.0
    %203 = vmatmul.mubr.f32.gmra.mrb[0].mxu0 %v121
    %v204 = vpop.f32.mrb[0].mxu0
    %v205 = vadd.f32 %v106, %v204
    %v206 = vpop.f32.mrb[0].mxu0
    %v207 = vadd.f32 %v106, %v206
    %208 = vmatprep.mubr.f32.mxu0 0.0
    %209 = vmatmul.mubr.f32.gmra.mrb[0].mxu0 %v124
    %v210 = vpop.f32.mrb[0].mxu0
    %v211 = vadd.f32 %v111, %v210
    %v212 = vpop.f32.mrb[0].mxu0
    %v213 = vadd.f32 %v111, %v212
    %214 = vdwg.mxu0
    %v215 = vmax.f32 %v193, 0.0
    %v216 = vmax.f32 %v195, 0.0
    %v217 = vmax.f32 %v199, 0.0
    %v218 = vmax.f32 %v201, 0.0
    %v219 = vmax.f32 %v205, 0.0
    %v220 = vmax.f32 %v207, 0.0
    %v221 = vmax.f32 %v211, 0.0
    %v222 = vmax.f32 %v213, 0.0
    %224 = vset.pattern.permute.xlu0 0
    %225 = vperm.xlu0 %224, %v56
    %v226 = vpop.permute.xlu0 %225
    %229 = vset.pattern.permute.xlu0 0
    %230 = vperm.xlu0 %229, %v57
    %v231 = vpop.permute.xlu0 %230
    %234 = vset.pattern.permute.xlu0 0
    %235 = vperm.xlu0 %234, %v58
    %v236 = vpop.permute.xlu0 %235
    %239 = vset.pattern.permute.xlu0 0
    %240 = vperm.xlu0 %239, %v59
    %v241 = vpop.permute.xlu0 %240
    %v244 = vsel %vm113, %v44, 0
    %v247 = vsel %vm113, %v45, 0
    %v250 = vsel %vm113, %v46, 0
    %v253 = vsel %vm113, %v47, 0
    %255 = vmatprep.subr.mxu0 %v216
    %256 = vmatpush1.msra.mxu0 %v215
    %257 = vmatprep.subr.mxu0 %v218
    %258 = vmatpush1.msra.mxu0 %v217
    %259 = vmatprep.subr.mxu0 %v220
    %260 = vmatpush1.msra.mxu0 %v219
    %261 = vmatprep.subr.mxu0 %v222
    %262 = vmatpush1.msra.mxu0 %v221
    %263 = vmatprep.subr.mxu0 0.0
    %264 = vmatpush1.msra.mxu0 0.0
    %265 = vmatprep.subr.mxu0 0.0
    %266 = vmatpush1.msra.mxu0 0.0
    %267 = vmatprep.subr.mxu0 0.0
    %268 = vmatpush1.msra.mxu0 0.0
    %269 = vmatprep.subr.mxu0 0.0
    %270 = vmatpush1.msra.mxu0 0.0
    %271 = vmatprep.subr.mxu0 0.0
    %272 = vmatpush1.msra.mxu0 0.0
    %273 = vmatprep.subr.mxu0 0.0
    %274 = vmatpush1.msra.mxu0 0.0
    %275 = vmatprep.subr.mxu0 0.0
    %276 = vmatpush1.msra.mxu0 0.0
    %277 = vmatprep.subr.mxu0 0.0
    %278 = vmatpush1.msra.mxu0 0.0
    %279 = vmatprep.subr.mxu0 0.0
    %280 = vmatpush1.msra.mxu0 0.0
    %281 = vmatprep.subr.mxu0 0.0
    %282 = vmatpush1.msra.mxu0 0.0
    %283 = vmatprep.subr.mxu0 0.0
    %284 = vmatpush1.msra.mxu0 0.0
    %285 = vmatprep.subr.mxu0 0.0
    %286 = vmatpush1.msra.mxu0 0.0
    %287 = vmatprep.subr.mxu0 0.0
    %288 = vmatpush1.msra.mxu0 0.0
    %289 = vmatprep.subr.mxu0 0.0
    %290 = vmatpush1.msra.mxu0 0.0
    %291 = vmatprep.subr.mxu0 0.0
    %292 = vmatpush1.msra.mxu0 0.0
    %293 = vmatprep.subr.mxu0 0.0
    %294 = vmatpush1.msra.mxu0 0.0
    %295 = vmatprep.subr.mxu0 0.0
    %296 = vmatpush1.msra.mxu0 0.0
    %297 = vmatprep.subr.mxu0 0.0
    %298 = vmatpush1.msra.mxu0 0.0
    %299 = vmatprep.subr.mxu0 0.0
    %300 = vmatpush1.msra.mxu0 0.0
    %301 = vmatprep.subr.mxu0 0.0
    %302 = vmatpush1.msra.mxu0 0.0
    %303 = vmatprep.subr.mxu0 0.0
    %304 = vmatpush1.msra.mxu0 0.0
    %305 = vmatprep.subr.mxu0 0.0
    %306 = vmatpush1.msra.mxu0 0.0
    %307 = vmatprep.subr.mxu0 0.0
    %308 = vmatpush1.msra.mxu0 0.0
    %309 = vmatprep.subr.mxu0 0.0
    %310 = vmatpush1.msra.mxu0 0.0
    %311 = vmatprep.subr.mxu0 0.0
    %312 = vmatpush1.msra.mxu0 0.0
    %313 = vmatprep.subr.mxu0 0.0
    %314 = vmatpush1.msra.mxu0 0.0
    %315 = vmatprep.subr.mxu0 0.0
    %316 = vmatpush1.msra.mxu0 0.0
    %317 = vmatprep.subr.mxu0 0.0
    %318 = vmatpush1.msra.mxu0 0.0
    %319 = vmatprep.mubr.f32.mxu0 0.0
    %320 = vmatmul.mubr.f32.gmra.mrb[0].mxu0 %v244
    %v321 = vpop.f32.mrb[0].mxu0
    %v322 = vadd.f32 %v226, %v321
    %v323 = vpop.f32.mrb[0].mxu0
    %v324 = vadd.f32 %v226, %v323
    %325 = vmatprep.mubr.f32.mxu0 0.0
    %326 = vmatmul.mubr.f32.gmra.mrb[0].mxu0 %v247
    %v327 = vpop.f32.mrb[0].mxu0
    %v328 = vadd.f32 %v231, %v327
    %v329 = vpop.f32.mrb[0].mxu0
    %v330 = vadd.f32 %v231, %v329
    %331 = vmatprep.mubr.f32.mxu0 0.0
    %332 = vmatmul.mubr.f32.gmra.mrb[0].mxu0 %v250
    %v333 = vpop.f32.mrb[0].mxu0
    %v334 = vadd.f32 %v236, %v333
    %v335 = vpop.f32.mrb[0].mxu0
    %v336 = vadd.f32 %v236, %v335
    %337 = vmatprep.mubr.f32.mxu0 0.0
    %338 = vmatmul.mubr.f32.gmra.mrb[0].mxu0 %v253
    %v339 = vpop.f32.mrb[0].mxu0
    %v340 = vadd.f32 %v241, %v339
    %v341 = vpop.f32.mrb[0].mxu0
    %v342 = vadd.f32 %v241, %v341
    %343 = vdwg.mxu0
    %v344 = vmax.f32 %v322, 0.0
    %v345 = vmax.f32 %v324, 0.0
    %v346 = vmax.f32 %v328, 0.0
    %v347 = vmax.f32 %v330, 0.0
    %v348 = vmax.f32 %v334, 0.0
    %v349 = vmax.f32 %v336, 0.0
    %v350 = vmax.f32 %v340, 0.0
    %v351 = vmax.f32 %v342, 0.0
    %353 = vset.pattern.permute.xlu0 0
    %354 = vperm.xlu0 %353, %v48
    %v355 = vpop.permute.xlu0 %354
    %358 = vset.pattern.permute.xlu0 0
    %359 = vperm.xlu0 %358, %v49
    %v360 = vpop.permute.xlu0 %359
    %363 = vset.pattern.permute.xlu0 0
    %364 = vperm.xlu0 %363, %v50
    %v365 = vpop.permute.xlu0 %364
    %368 = vset.pattern.permute.xlu0 0
    %369 = vperm.xlu0 %368, %v51
    %v370 = vpop.permute.xlu0 %369
    %v372 = vmul.f32 %v355, %v344
    %v373 = vmul.f32 %v355, %v345
    %v374 = vmul.f32 %v360, %v346
    %v375 = vmul.f32 %v360, %v347
    %v376 = vmul.f32 %v365, %v348
    %v377 = vmul.f32 %v365, %v349
    %v378 = vmul.f32 %v370, %v350
    %v379 = vmul.f32 %v370, %v351
    %v380 = vadd.f32 %v372, %v374
    %v381 = vadd.f32 %v380, %v376
    %v382 = vadd.f32 %v381, %v378
    %v383 = vrot.slane %v382, 4
    %v384 = vadd.f32 %v382, %v383
    %v385 = vrot.slane %v384, 2
    %v386 = vadd.f32 %v384, %v385
    %v387 = vrot.slane %v386, 1
    %v388 = vadd.f32 %v386, %v387
    %v389 = vadd.f32 %v373, %v375
    %v390 = vadd.f32 %v389, %v377
    %v391 = vadd.f32 %v390, %v379
    %v392 = vrot.slane %v391, 4
    %v393 = vadd.f32 %v391, %v392
    %v394 = vrot.slane %v393, 2
    %v395 = vadd.f32 %v393, %v394
    %v396 = vrot.slane %v395, 1
    %v397 = vadd.f32 %v395, %v396
    %399 = vset.pattern.permute.xlu0 0
    %400 = vperm.xlu0 %399, %v60
    %v401 = vpop.permute.xlu0 %400
    %v403 = vlaneseq
    %v404 = vshrl.u32 %v403, 7
    %v405 = vsub.s32 0, %v404
    %v406 = vrot.slane %v401, %v405
    %v407 = vadd.f32 %v388, %v406
    %v408 = vadd.f32 %v397, %v406
    %v411 = vcombine.low %v407, %v408
    %v413 = vunpack.c.l.s4 1966171168
    %v414 = vunpack.c.0.s8 %v413
    %v415 = vlaneseq
    %v416 = vshrl.u32 %v415, 7
    %v417 = vsub.s32 %v414, %v416
    %v418 = vrot.slane %v411, %v417
    %v420 = vunpack.c.l.s4 1966171168
    %v421 = vunpack.c.0.s8 %v420
    %v422 = vlaneseq
    %v423 = vshrl.u32 %v422, 7
    %v424 = vsub.s32 %v421, %v423
    %v425 = vrot.slane %v418, %v424
    %v427 = vlaneseq
    %vm428 = vcmp.ge.s32.totalorder %v427, 0
    %vm429 = vcmp.lt.s32.totalorder %v427, 256
    %vm430 = vmand %vm428, %vm429
    %431 = vst.msk [vmem:[#allocation3] sm:$0x3] %vm430, %v425
    %s432 = scalar_lea.vmem %s1, 32
    %v433 = vld [vmem:[%s432] sm:$0xff]
    %v434 = vld [vmem:[%s432 + $0x8] sm:$0xff]
    %v435 = vld [vmem:[%s432 + $0x10] sm:$0xff]
    %v436 = vld [vmem:[%s432 + $0x18] sm:$0xff]
    %438 = vset.pattern.permute.xlu0 0
    %439 = vperm.xlu0 %438, %v433
    %v440 = vpop.permute.xlu0 %439
    %443 = vset.pattern.permute.xlu0 0
    %444 = vperm.xlu0 %443, %v434
    %v445 = vpop.permute.xlu0 %444
    %448 = vset.pattern.permute.xlu0 0
    %449 = vperm.xlu0 %448, %v435
    %v450 = vpop.permute.xlu0 %449
    %453 = vset.pattern.permute.xlu0 0
    %454 = vperm.xlu0 %453, %v436
    %v455 = vpop.permute.xlu0 %454
    %v457 = vmul.f32 %v32, %v440
    %v458 = vmul.f32 %v33, %v440
    %v459 = vmul.f32 %v34, %v445
    %v460 = vmul.f32 %v35, %v445
    %v461 = vmul.f32 %v36, %v450
    %v462 = vmul.f32 %v37, %v450
    %v463 = vmul.f32 %v38, %v455
    %v464 = vmul.f32 %v39, %v455
    %465 = vmatprep.subr.mxu0 %v458
    %466 = vmatpush1.msra.mxu0 %v457
    %467 = vmatprep.subr.mxu0 %v460
    %468 = vmatpush1.msra.mxu0 %v459
    %469 = vmatprep.subr.mxu0 %v462
    %470 = vmatpush1.msra.mxu0 %v461
    %471 = vmatprep.subr.mxu0 %v464
    %472 = vmatpush1.msra.mxu0 %v463
    %473 = vmatprep.subr.mxu0 0.0
    %474 = vmatpush1.msra.mxu0 0.0
    %475 = vmatprep.subr.mxu0 0.0
    %476 = vmatpush1.msra.mxu0 0.0
    %477 = vmatprep.subr.mxu0 0.0
    %478 = vmatpush1.msra.mxu0 0.0
    %479 = vmatprep.subr.mxu0 0.0
    %480 = vmatpush1.msra.mxu0 0.0
    %481 = vmatprep.subr.mxu0 0.0
    %482 = vmatpush1.msra.mxu0 0.0
    %483 = vmatprep.subr.mxu0 0.0
    %484 = vmatpush1.msra.mxu0 0.0
    %485 = vmatprep.subr.mxu0 0.0
    %486 = vmatpush1.msra.mxu0 0.0
    %487 = vmatprep.subr.mxu0 0.0
    %488 = vmatpush1.msra.mxu0 0.0
    %489 = vmatprep.subr.mxu0 0.0
    %490 = vmatpush1.msra.mxu0 0.0
    %491 = vmatprep.subr.mxu0 0.0
    %492 = vmatpush1.msra.mxu0 0.0
    %493 = vmatprep.subr.mxu0 0.0
    %494 = vmatpush1.msra.mxu0 0.0
    %495 = vmatprep.subr.mxu0 0.0
    %496 = vmatpush1.msra.mxu0 0.0
    %497 = vmatprep.subr.mxu0 0.0
    %498 = vmatpush1.msra.mxu0 0.0
    %499 = vmatprep.subr.mxu0 0.0
    %500 = vmatpush1.msra.mxu0 0.0
    %501 = vmatprep.subr.mxu0 0.0
    %502 = vmatpush1.msra.mxu0 0.0
    %503 = vmatprep.subr.mxu0 0.0
    %504 = vmatpush1.msra.mxu0 0.0
    %505 = vmatprep.subr.mxu0 0.0
    %506 = vmatpush1.msra.mxu0 0.0
    %507 = vmatprep.subr.mxu0 0.0
    %508 = vmatpush1.msra.mxu0 0.0
    %509 = vmatprep.subr.mxu0 0.0
    %510 = vmatpush1.msra.mxu0 0.0
    %511 = vmatprep.subr.mxu0 0.0
    %512 = vmatpush1.msra.mxu0 0.0
    %513 = vmatprep.subr.mxu0 0.0
    %514 = vmatpush1.msra.mxu0 0.0
    %515 = vmatprep.subr.mxu0 0.0
    %516 = vmatpush1.msra.mxu0 0.0
    %517 = vmatprep.subr.mxu0 0.0
    %518 = vmatpush1.msra.mxu0 0.0
    %519 = vmatprep.subr.mxu0 0.0
    %520 = vmatpush1.msra.mxu0 0.0
    %521 = vmatprep.subr.mxu0 0.0
    %522 = vmatpush1.msra.mxu0 0.0
    %523 = vmatprep.subr.mxu0 0.0
    %524 = vmatpush1.msra.mxu0 0.0
    %525 = vmatprep.subr.mxu0 0.0
    %526 = vmatpush1.msra.mxu0 0.0
    %527 = vmatprep.subr.mxu0 0.0
    %528 = vmatpush1.msra.mxu0 0.0
    %529 = vmatprep.mubr.f32.mxu0 0.0
    %530 = vmatmul.mubr.f32.gmra.mrb[0].mxu0 %v115
    %v531 = vpop.f32.mrb[0].mxu0
    %v532 = vadd.f32 %v96, %v531
    %v533 = vpop.f32.mrb[0].mxu0
    %v534 = vadd.f32 %v96, %v533
    %535 = vmatprep.mubr.f32.mxu0 0.0
    %536 = vmatmul.mubr.f32.gmra.mrb[0].mxu0 %v118
    %v537 = vpop.f32.mrb[0].mxu0
    %v538 = vadd.f32 %v101, %v537
    %v539 = vpop.f32.mrb[0].mxu0
    %v540 = vadd.f32 %v101, %v539
    %541 = vmatprep.mubr.f32.mxu0 0.0
    %542 = vmatmul.mubr.f32.gmra.mrb[0].mxu0 %v121
    %v543 = vpop.f32.mrb[0].mxu0
    %v544 = vadd.f32 %v106, %v543
    %v545 = vpop.f32.mrb[0].mxu0
    %v546 = vadd.f32 %v106, %v545
    %547 = vmatprep.mubr.f32.mxu0 0.0
    %548 = vmatmul.mubr.f32.gmra.mrb[0].mxu0 %v124
    %v549 = vpop.f32.mrb[0].mxu0
    %v550 = vadd.f32 %v111, %v549
    %v551 = vpop.f32.mrb[0].mxu0
    %v552 = vadd.f32 %v111, %v551
    %553 = vdwg.mxu0
    %v554 = vmax.f32 %v532, 0.0
    %v555 = vmax.f32 %v534, 0.0
    %v556 = vmax.f32 %v538, 0.0
    %v557 = vmax.f32 %v540, 0.0
    %v558 = vmax.f32 %v544, 0.0
    %v559 = vmax.f32 %v546, 0.0
    %v560 = vmax.f32 %v550, 0.0
    %v561 = vmax.f32 %v552, 0.0
    %562 = vmatprep.subr.mxu0 %v555
    %563 = vmatpush1.msra.mxu0 %v554
    %564 = vmatprep.subr.mxu0 %v557
    %565 = vmatpush1.msra.mxu0 %v556
    %566 = vmatprep.subr.mxu0 %v559
    %567 = vmatpush1.msra.mxu0 %v558
    %568 = vmatprep.subr.mxu0 %v561
    %569 = vmatpush1.msra.mxu0 %v560
    %570 = vmatprep.subr.mxu0 0.0
    %571 = vmatpush1.msra.mxu0 0.0
    %572 = vmatprep.subr.mxu0 0.0
    %573 = vmatpush1.msra.mxu0 0.0
    %574 = vmatprep.subr.mxu0 0.0
    %575 = vmatpush1.msra.mxu0 0.0
    %576 = vmatprep.subr.mxu0 0.0
    %577 = vmatpush1.msra.mxu0 0.0
    %578 = vmatprep.subr.mxu0 0.0
    %579 = vmatpush1.msra.mxu0 0.0
    %580 = vmatprep.subr.mxu0 0.0
    %581 = vmatpush1.msra.mxu0 0.0
    %582 = vmatprep.subr.mxu0 0.0
    %583 = vmatpush1.msra.mxu0 0.0
    %584 = vmatprep.subr.mxu0 0.0
    %585 = vmatpush1.msra.mxu0 0.0
    %586 = vmatprep.subr.mxu0 0.0
    %587 = vmatpush1.msra.mxu0 0.0
    %588 = vmatprep.subr.mxu0 0.0
    %589 = vmatpush1.msra.mxu0 0.0
    %590 = vmatprep.subr.mxu0 0.0
    %591 = vmatpush1.msra.mxu0 0.0
    %592 = vmatprep.subr.mxu0 0.0
    %593 = vmatpush1.msra.mxu0 0.0
    %594 = vmatprep.subr.mxu0 0.0
    %595 = vmatpush1.msra.mxu0 0.0
    %596 = vmatprep.subr.mxu0 0.0
    %597 = vmatpush1.msra.mxu0 0.0
    %598 = vmatprep.subr.mxu0 0.0
    %599 = vmatpush1.msra.mxu0 0.0
    %600 = vmatprep.subr.mxu0 0.0
    %601 = vmatpush1.msra.mxu0 0.0
    %602 = vmatprep.subr.mxu0 0.0
    %603 = vmatpush1.msra.mxu0 0.0
    %604 = vmatprep.subr.mxu0 0.0
    %605 = vmatpush1.msra.mxu0 0.0
    %606 = vmatprep.subr.mxu0 0.0
    %607 = vmatpush1.msra.mxu0 0.0
    %608 = vmatprep.subr.mxu0 0.0
    %609 = vmatpush1.msra.mxu0 0.0
    %610 = vmatprep.subr.mxu0 0.0
    %611 = vmatpush1.msra.mxu0 0.0
    %612 = vmatprep.subr.mxu0 0.0
    %613 = vmatpush1.msra.mxu0 0.0
    %614 = vmatprep.subr.mxu0 0.0
    %615 = vmatpush1.msra.mxu0 0.0
    %616 = vmatprep.subr.mxu0 0.0
    %617 = vmatpush1.msra.mxu0 0.0
    %618 = vmatprep.subr.mxu0 0.0
    %619 = vmatpush1.msra.mxu0 0.0
    %620 = vmatprep.subr.mxu0 0.0
    %621 = vmatpush1.msra.mxu0 0.0
    %622 = vmatprep.subr.mxu0 0.0
    %623 = vmatpush1.msra.mxu0 0.0
    %624 = vmatprep.subr.mxu0 0.0
    %625 = vmatpush1.msra.mxu0 0.0
    %626 = vmatprep.mubr.f32.mxu0 0.0
    %627 = vmatmul.mubr.f32.gmra.mrb[0].mxu0 %v244
    %v628 = vpop.f32.mrb[0].mxu0
    %v629 = vadd.f32 %v226, %v628
    %v630 = vpop.f32.mrb[0].mxu0
    %v631 = vadd.f32 %v226, %v630
    %632 = vmatprep.mubr.f32.mxu0 0.0
    %633 = vmatmul.mubr.f32.gmra.mrb[0].mxu0 %v247
    %v634 = vpop.f32.mrb[0].mxu0
    %v635 = vadd.f32 %v231, %v634
    %v636 = vpop.f32.mrb[0].mxu0
    %v637 = vadd.f32 %v231, %v636
    %638 = vmatprep.mubr.f32.mxu0 0.0
    %639 = vmatmul.mubr.f32.gmra.mrb[0].mxu0 %v250
    %v640 = vpop.f32.mrb[0].mxu0
    %v641 = vadd.f32 %v236, %v640
    %v642 = vpop.f32.mrb[0].mxu0
    %v643 = vadd.f32 %v236, %v642
    %644 = vmatprep.mubr.f32.mxu0 0.0
    %645 = vmatmul.mubr.f32.gmra.mrb[0].mxu0 %v253
    %v646 = vpop.f32.mrb[0].mxu0
    %v647 = vadd.f32 %v241, %v646
    %v648 = vpop.f32.mrb[0].mxu0
    %v649 = vadd.f32 %v241, %v648
    %650 = vdwg.mxu0
    %v651 = vmax.f32 %v629, 0.0
    %v652 = vmax.f32 %v631, 0.0
    %v653 = vmax.f32 %v635, 0.0
    %v654 = vmax.f32 %v637, 0.0
    %v655 = vmax.f32 %v641, 0.0
    %v656 = vmax.f32 %v643, 0.0
    %v657 = vmax.f32 %v647, 0.0
    %v658 = vmax.f32 %v649, 0.0
    %v659 = vmul.f32 %v355, %v651
    %v660 = vmul.f32 %v355, %v652
    %v661 = vmul.f32 %v360, %v653
    %v662 = vmul.f32 %v360, %v654
    %v663 = vmul.f32 %v365, %v655
    %v664 = vmul.f32 %v365, %v656
    %v665 = vmul.f32 %v370, %v657
    %v666 = vmul.f32 %v370, %v658
    %v667 = vadd.f32 %v659, %v661
    %v668 = vadd.f32 %v667, %v663
    %v669 = vadd.f32 %v668, %v665
    %v670 = vrot.slane %v669, 4
    %v671 = vadd.f32 %v669, %v670
    %v672 = vrot.slane %v671, 2
    %v673 = vadd.f32 %v671, %v672
    %v674 = vrot.slane %v673, 1
    %v675 = vadd.f32 %v673, %v674
    %v676 = vadd.f32 %v660, %v662
    %v677 = vadd.f32 %v676, %v664
    %v678 = vadd.f32 %v677, %v666
    %v679 = vrot.slane %v678, 4
    %v680 = vadd.f32 %v678, %v679
    %v681 = vrot.slane %v680, 2
    %v682 = vadd.f32 %v680, %v681
    %v683 = vrot.slane %v682, 1
    %v684 = vadd.f32 %v682, %v683
    %v685 = vadd.f32 %v675, %v406
    %v686 = vadd.f32 %v684, %v406
    %v689 = vcombine.low %v685, %v686
    %v691 = vunpack.c.l.s4 1966171168
    %v692 = vunpack.c.0.s8 %v691
    %v693 = vlaneseq
    %v694 = vshrl.u32 %v693, 7
    %v695 = vsub.s32 %v692, %v694
    %v696 = vrot.slane %v689, %v695
    %v698 = vunpack.c.l.s4 1966171168
    %v699 = vunpack.c.0.s8 %v698
    %v700 = vlaneseq
    %v701 = vshrl.u32 %v700, 7
    %v702 = vsub.s32 %v699, %v701
    %v703 = vrot.slane %v696, %v702
    %s705 = scalar_lea.vmem [#allocation3], 2
    %706 = vst.msk [vmem:[%s705] sm:$0x3] %vm430, %v703
    // Predicated region
    $region34: #{tpu_custom_call.1} parent=1 // pred_check
      _
    $region35: #{tpu_custom_call.1} parent=1 // pred_check_branch
      %708 = sbr.rel (0) target = $region37
    $region36: #{tpu_custom_call.1} parent=1 // pred_region
      %s710 = ssub.s32 64, 64
      %711 = vsyncadd [#allocation4], %s710
      %s712 = sshll.u32 [#allocation3], 4
      %s713 = int_to_ptr.vmem [resolvable:$true] %s712
      %718 = dma.vmem_to_hbm [thread:$0]  %s713, 64, %s8, [#allocation4], 32, 32, 2
    $region37: #{tpu_custom_call.1} parent=1 // pred_fallthru
      _
    // Predicated region
    $region38: #{tpu_custom_call.1} parent=1 // pred_check
      _
    $region39: #{tpu_custom_call.1} parent=1 // pred_check_branch
      %720 = sbr.rel (0) target = $region41
    $region40: #{tpu_custom_call.1} parent=1 // pred_region
      %721 = dma.done [#allocation4], 64
    $region41: #{tpu_custom_call.1} parent=1 // pred_fallthru
      _
    %722 = vsyncpa [#allocation4], 1

</llo_original>
